<compile_context>
chip_gen: v6e
topology: v6e:2x2x1
jax: 0.10.0
libtpu: 0.0.40
codegen_flags: <defaults>
</compile_context>

<pallas_src>
import functools

import jax
import jax.numpy as jnp
from jax import lax
from jax.experimental import pallas as pl
from jax.experimental.pallas import tpu as pltpu

LANES = 128
SUBLANES = 8
TILE_ROWS = 2048      # (2048, 128) f32 block = 1 MiB per input per grid step


def _round_up(x, m):
    return ((x + m - 1) // m) * m


def _num_tensorcores():
    """2 on v7x (2 TensorCores / chip), 1 on v5e / v6e.  Conservative fallback: 1."""
    try:
        dev = jax.devices()[0]
        if dev.platform != "tpu":
            return 1
        kind = str(getattr(dev, "device_kind", "")).lower()
        if "7" in kind:           # e.g. "tpu7x"
            return 2
    except Exception:
        pass
    return 1


def _celoss_kernel(yt_ref, yp_ref, out_ref, *, inner_tiles, total_tiles,
                   tile_rows, valid_rows_last, binary_targets):
    o = pl.program_id(0)
    i = pl.program_id(1)
    t = o * inner_tiles + i          # global tile index (may exceed total_tiles-1)

    # Output block index is constant over i -> VMEM-resident accumulator.
    @pl.when(i == 0)
    def _init():
        out_ref[...] = jnp.zeros_like(out_ref)

    yt = yt_ref[...].astype(jnp.float32)
    yp = yp_ref[...].astype(jnp.float32)
    if binary_targets:
        # Hard {0,1} targets: identical value with a single log (half the EUP work).
        p = jnp.where(yt > 0.5, yp, 1.0 - yp)
        loss = -jnp.log(p + 1e-12)
    else:
        loss = (-yt * jnp.log(yp + 1e-12)
                - (1.0 - yt) * jnp.log(1.0 - yp + 1e-12))

    def vreg_sum(x):
        # Collapse the tile to one (8,128) vreg with pure VPU adds.
        return jnp.sum(x.reshape(tile_rows // SUBLANES, SUBLANES, LANES), axis=0)

    # Hot path (all full tiles): mask-free.
    @pl.when(t < total_tiles - 1)
    def _full():
        out_ref[0] += vreg_sum(loss)

    # Final tile: mask out-of-range rows only if it is actually partial (static).
    @pl.when(t == total_tiles - 1)
    def _last():
        if valid_rows_last < tile_rows:
            r = lax.broadcasted_iota(jnp.int32, loss.shape, 0)
            out_ref[0] += vreg_sum(jnp.where(r < valid_rows_last, loss, 0.0))
        else:
            out_ref[0] += vreg_sum(loss)

    # t > total_tiles - 1: duplicate clamped step on the trailing core split -> no-op.


def _run_main_slab(yt2, yp2, rows, nsplit, core_parallel, binary_targets):
    """Run the streaming-reduction kernel over a (rows, 128) slab; returns
    (nsplit, 8, 128) partial sums."""
    tile_rows = min(TILE_ROWS, _round_up(rows, SUBLANES))
    total_tiles = pl.cdiv(rows, tile_rows)
    nsplit = max(1, min(nsplit, total_tiles))
    inner_tiles = pl.cdiv(total_tiles, nsplit)
    valid_rows_last = rows - (total_tiles - 1) * tile_rows

    kernel = functools.partial(
        _celoss_kernel,
        inner_tiles=inner_tiles,
        total_tiles=total_tiles,
        tile_rows=tile_rows,
        valid_rows_last=valid_rows_last,
        binary_targets=binary_targets,
    )

    def in_map(o, i):
        # Clamp so duplicate trailing steps of the core split never index OOB.
        return (jnp.minimum(o * inner_tiles + i, total_tiles - 1), 0)

    n_elems = rows * LANES
    in_bytes = (jnp.dtype(yt2.dtype).itemsize + jnp.dtype(yp2.dtype).itemsize) * n_elems
    cost = pl.CostEstimate(
        flops=7 * n_elems,
        transcendentals=(1 if binary_targets else 2) * n_elems,
        bytes_accessed=in_bytes + nsplit * SUBLANES * LANES * 4,
    )

    lead_sem = (pltpu.CORE_PARALLEL
                if (core_parallel and nsplit > 1) else pltpu.ARBITRARY)

    return pl.pallas_call(
        kernel,
        out_shape=jax.ShapeDtypeStruct((nsplit, SUBLANES, LANES), jnp.float32),
        grid_spec=pltpu.PrefetchScalarGridSpec(
            num_scalar_prefetch=0,
            grid=(nsplit, inner_tiles),
            in_specs=[
                pl.BlockSpec((tile_rows, LANES), in_map),
                pl.BlockSpec((tile_rows, LANES), in_map),
            ],
            out_specs=pl.BlockSpec((1, SUBLANES, LANES), lambda o, i: (o, 0, 0)),
        ),
        compiler_params=pltpu.CompilerParams(
            dimension_semantics=(lead_sem, pltpu.ARBITRARY),
            vmem_limit_bytes=32 * 1024 * 1024,
        ),
        cost_estimate=cost,
    )(yt2, yp2)


def ce_loss(y_true, y_pred, *, assume_binary_targets=False):
    """Mean binary cross-entropy, matching CELoss.forward(y_true, y_pred).

    assume_binary_targets=True enables the single-log fast path; only valid for
    hard {0,1} targets (bit-identical result in that case)."""
    assert y_true.shape == y_pred.shape
    n_valid = int(y_true.size)

    yt_flat = jnp.ravel(y_true)
    yp_flat = jnp.ravel(y_pred)

    n_main = (n_valid // LANES) * LANES      # largest 128-aligned prefix
    n_tail = n_valid - n_main

    total = jnp.float32(0.0)

    if n_main:
        rows = n_main // LANES
        if n_tail:
            yt2 = yt_flat[:n_main].reshape(rows, LANES)
            yp2 = yp_flat[:n_main].reshape(rows, LANES)
        else:
            yt2 = yt_flat.reshape(rows, LANES)   # zero-copy reshape
            yp2 = yp_flat.reshape(rows, LANES)

        nsplit = _num_tensorcores()
        if nsplit > 1:
            try:
                partials = _run_main_slab(yt2, yp2, rows, nsplit, True,
                                          assume_binary_targets)
            except Exception:
                # Conservative fallback if CORE_PARALLEL is rejected on this chip.
                partials = _run_main_slab(yt2, yp2, rows, 1, False,
                                          assume_binary_targets)
        else:
            partials = _run_main_slab(yt2, yp2, rows, 1, False,
                                      assume_binary_targets)
        total = total + jnp.sum(partials)

    if n_tail:
        # <=127 ragged elements: plain jnp, folded into the same sum.
        yt_t = yt_flat[n_main:].astype(jnp.float32)
        yp_t = yp_flat[n_main:].astype(jnp.float32)
        tail = (-yt_t * jnp.log(yp_t + 1e-12)
                - (1.0 - yt_t) * jnp.log(1.0 - yp_t + 1e-12))
        total = total + jnp.sum(tail)

    return total / n_valid


def ce_loss_ref(y_true, y_pred):
    yt = y_true.astype(jnp.float32)
    yp = y_pred.astype(jnp.float32)
    pos = -yt * jnp.log(yp + 1e-12)
    neg = -(1.0 - yt) * jnp.log(1.0 - yp + 1e-12)
    return jnp.mean(pos + neg)


if __name__ == "__main__":
    key = jax.random.PRNGKey(0)
    k1, k2, k3, k4 = jax.random.split(key, 4)

    # Segmentation-style inputs (N, C, H, W): binary targets, probabilities.
    shape = (2, 4, 16, 16)
    y_true = (jax.random.uniform(k1, shape) > 0.5).astype(jnp.float32)
    y_pred = jax.random.uniform(k2, shape, minval=0.01, maxval=0.99).astype(jnp.float32)

    out = jax.block_until_ready(ce_loss(y_true, y_pred))
    ref = jax.block_until_ready(ce_loss_ref(y_true, y_pred))
    assert jnp.allclose(out, ref, rtol=1e-5, atol=1e-5), (out, ref)

    # Ragged size (not a multiple of 128): exercises the pad-free aligned slab
    # (with row masking) plus the jnp tail path.
    shape2 = (2, 3, 15, 15)
    y_true2 = (jax.random.uniform(k3, shape2) > 0.5).astype(jnp.float32)
    y_pred2 = jax.random.uniform(k4, shape2, minval=0.01, maxval=0.99).astype(jnp.float32)

    out2 = jax.block_until_ready(ce_loss(y_true2, y_pred2))
    ref2 = jax.block_until_ready(ce_loss_ref(y_true2, y_pred2))
    assert jnp.allclose(out2, ref2, rtol=1e-5, atol=1e-5), (out2, ref2)

    # Hard-binary fast path (single log): identical result for {0,1} targets.
    out3 = jax.block_until_ready(ce_loss(y_true, y_pred, assume_binary_targets=True))
    assert jnp.allclose(out3, ref, rtol=1e-5, atol=1e-5), (out3, ref)

    print("KERNEL_OK")
</pallas_src>

<mosaic_0001>
module attributes {stable_mosaic.version = 11 : i64} {
  func.func @_celoss_kernel(%arg0: i32, %arg1: i32, %arg2: memref<16x128xf32, #tpu.memory_space<vmem>>, %arg3: memref<16x128xf32, #tpu.memory_space<vmem>>, %arg4: memref<1x8x128xf32, #tpu.memory_space<vmem>>) attributes {dimension_semantics = [#tpu.dimension_semantics<arbitrary>, #tpu.dimension_semantics<arbitrary>], iteration_bounds = array<i64: 1, 1>, scalar_prefetch = 0 : i64, scratch_operands = 0 : i64, tpu.core_type = #tpu.core_type<tc>, window_params = [{transform_indices = @transform_0, window_bounds = array<i64: 16, 128>}, {transform_indices = @transform_1, window_bounds = array<i64: 16, 128>}, {transform_indices = @transform_2, window_bounds = array<i64: 1, 8, 128>}]} {
    %c1_i32 = arith.constant 1 : i32
    %0 = arith.muli %arg0, %c1_i32 : i32
    %1 = arith.addi %0, %arg1 : i32
    %c0_i32 = arith.constant 0 : i32
    %2 = arith.cmpi eq, %arg1, %c0_i32 : i32
    %3 = arith.extui %2 : i1 to i32
    %c0_i32_0 = arith.constant 0 : i32
    %4 = arith.cmpi ne, %3, %c0_i32_0 : i32
    scf.if %4 {
      %cst_12 = arith.constant 0.000000e+00 : f32
      %28 = vector.broadcast %cst_12 : f32 to vector<1x8x128xf32>
      %c0_13 = arith.constant 0 : index
      %c0_14 = arith.constant 0 : index
      %c0_15 = arith.constant 0 : index
      %29 = vector.load %arg4[%c0_13, %c0_14, %c0_15] : memref<1x8x128xf32, #tpu.memory_space<vmem>>, vector<1x8x128xf32>
      tpu.vector_store %arg4[%c0_13, %c0_14, %c0_15], %28 {strides = array<i32>} : memref<1x8x128xf32, #tpu.memory_space<vmem>>, vector<1x8x128xf32>,
    } else {
    }
    %c0 = arith.constant 0 : index
    %c0_1 = arith.constant 0 : index
    %5 = vector.load %arg2[%c0, %c0_1] : memref<16x128xf32, #tpu.memory_space<vmem>>, vector<16x128xf32>
    %c0_2 = arith.constant 0 : index
    %c0_3 = arith.constant 0 : index
    %6 = vector.load %arg3[%c0_2, %c0_3] : memref<16x128xf32, #tpu.memory_space<vmem>>, vector<16x128xf32>
    %cst = arith.constant 0.000000e+00 : f32
    %7 = vector.broadcast %cst : f32 to vector<16x128xf32>
    %8 = arith.subf %7, %5 : vector<16x128xf32>
    %cst_4 = arith.constant 9.99999996E-13 : f32
    %9 = vector.broadcast %cst_4 : f32 to vector<16x128xf32>
    %10 = arith.addf %6, %9 : vector<16x128xf32>
    %11 = math.log %10 : vector<16x128xf32>
    %12 = arith.mulf %8, %11 : vector<16x128xf32>
    %cst_5 = arith.constant 1.000000e+00 : f32
    %13 = vector.broadcast %cst_5 : f32 to vector<16x128xf32>
    %14 = arith.subf %13, %5 : vector<16x128xf32>
    %cst_6 = arith.constant 1.000000e+00 : f32
    %15 = vector.broadcast %cst_6 : f32 to vector<16x128xf32>
    %16 = arith.subf %15, %6 : vector<16x128xf32>
    %cst_7 = arith.constant 9.99999996E-13 : f32
    %17 = vector.broadcast %cst_7 : f32 to vector<16x128xf32>
    %18 = arith.addf %16, %17 : vector<16x128xf32>
    %19 = math.log %18 : vector<16x128xf32>
    %20 = arith.mulf %14, %19 : vector<16x128xf32>
    %21 = arith.subf %12, %20 : vector<16x128xf32>
    %c0_i32_8 = arith.constant 0 : i32
    %22 = arith.cmpi slt, %1, %c0_i32_8 : i32
    %23 = arith.extui %22 : i1 to i32
    %c0_i32_9 = arith.constant 0 : i32
    %24 = arith.cmpi ne, %23, %c0_i32_9 : i32
    scf.if %24 {
      %c0_12 = arith.constant 0 : index
      %c0_13 = arith.constant 0 : index
      %c0_14 = arith.constant 0 : index
      %28 = vector.load %arg4[%c0_12, %c0_13, %c0_14] : memref<1x8x128xf32, #tpu.memory_space<vmem>>, vector<1x8x128xf32>
      %29 = vector.shape_cast %28 : vector<1x8x128xf32> to vector<8x128xf32>
      %30 = vector.shape_cast %21 : vector<16x128xf32> to vector<2x8x128xf32>
      %cst_15 = arith.constant dense<0.000000e+00> : vector<8x128xf32>
      %31 = vector.multi_reduction <add>, %30, %cst_15 [0] : vector<2x8x128xf32> to vector<8x128xf32>
      %32 = arith.addf %29, %31 : vector<8x128xf32>
      %c0_16 = arith.constant 0 : index
      %c0_17 = arith.constant 0 : index
      %c0_18 = arith.constant 0 : index
      %33 = vector.load %arg4[%c0_16, %c0_17, %c0_18] : memref<1x8x128xf32, #tpu.memory_space<vmem>>, vector<1x8x128xf32>
      %34 = vector.shape_cast %33 : vector<1x8x128xf32> to vector<8x128xf32>
      %35 = vector.shape_cast %32 : vector<8x128xf32> to vector<1x8x128xf32>
      tpu.vector_store %arg4[%c0_16, %c0_17, %c0_18], %35 {strides = array<i32>} : memref<1x8x128xf32, #tpu.memory_space<vmem>>, vector<1x8x128xf32>,
    } else {
    }
    %c0_i32_10 = arith.constant 0 : i32
    %25 = arith.cmpi eq, %1, %c0_i32_10 : i32
    %26 = arith.extui %25 : i1 to i32
    %c0_i32_11 = arith.constant 0 : i32
    %27 = arith.cmpi ne, %26, %c0_i32_11 : i32
    scf.if %27 {
      %c0_12 = arith.constant 0 : index
      %c0_13 = arith.constant 0 : index
      %c0_14 = arith.constant 0 : index
      %28 = vector.load %arg4[%c0_12, %c0_13, %c0_14] : memref<1x8x128xf32, #tpu.memory_space<vmem>>, vector<1x8x128xf32>
      %29 = vector.shape_cast %28 : vector<1x8x128xf32> to vector<8x128xf32>
      %30 = vector.shape_cast %21 : vector<16x128xf32> to vector<2x8x128xf32>
      %cst_15 = arith.constant dense<0.000000e+00> : vector<8x128xf32>
      %31 = vector.multi_reduction <add>, %30, %cst_15 [0] : vector<2x8x128xf32> to vector<8x128xf32>
      %32 = arith.addf %29, %31 : vector<8x128xf32>
      %c0_16 = arith.constant 0 : index
      %c0_17 = arith.constant 0 : index
      %c0_18 = arith.constant 0 : index
      %33 = vector.load %arg4[%c0_16, %c0_17, %c0_18] : memref<1x8x128xf32, #tpu.memory_space<vmem>>, vector<1x8x128xf32>
      %34 = vector.shape_cast %33 : vector<1x8x128xf32> to vector<8x128xf32>
      %35 = vector.shape_cast %32 : vector<8x128xf32> to vector<1x8x128xf32>
      tpu.vector_store %arg4[%c0_16, %c0_17, %c0_18], %35 {strides = array<i32>} : memref<1x8x128xf32, #tpu.memory_space<vmem>>, vector<1x8x128xf32>,
    } else {
    }
    return
  }
  func.func @transform_0(%arg0: i32, %arg1: i32) -> (i32, i32) {
    %c1_i32 = arith.constant 1 : i32
    %0 = arith.muli %arg0, %c1_i32 : i32
    %1 = arith.addi %0, %arg1 : i32
    %c0_i32 = arith.constant 0 : i32
    %2 = arith.minsi %1, %c0_i32 : i32
    %c0_i32_0 = arith.constant 0 : i32
    %c0_i32_1 = arith.constant 0 : i32
    return %2, %c0_i32_0 : i32, i32
  }
  func.func @transform_1(%arg0: i32, %arg1: i32) -> (i32, i32) {
    %c1_i32 = arith.constant 1 : i32
    %0 = arith.muli %arg0, %c1_i32 : i32
    %1 = arith.addi %0, %arg1 : i32
    %c0_i32 = arith.constant 0 : i32
    %2 = arith.minsi %1, %c0_i32 : i32
    %c0_i32_0 = arith.constant 0 : i32
    %c0_i32_1 = arith.constant 0 : i32
    return %2, %c0_i32_0 : i32, i32
  }
  func.func @transform_2(%arg0: i32, %arg1: i32) -> (i32, i32, i32) {
    %c0_i32 = arith.constant 0 : i32
    %c0_i32_0 = arith.constant 0 : i32
    %c0_i32_1 = arith.constant 0 : i32
    return %arg0, %c0_i32, %c0_i32_0 : i32, i32, i32
  }
}

</mosaic_0001>

<llo_original>
// kernel: tpu_custom_call.1
$region0: #{tpu_custom_call.1}
  #allocation0 [shape = 'u32[]', space=smem, size = 0x4, offset = 0x4, fixed_abs, tag = 'smem constant byte address 0x4 - core index']
  #allocation1 [shape = 'u32[144,128]{1,0:T(1,128)}', space=vmem, size = 0x12000, scoped, tag = 'internal scratch']
  %s0 = inlined_call_operand.hbm [shape: f32[16,128], index: 0, kind: input, shape index: {}]
  %s1 = inlined_call_operand.hbm [shape: f32[16,128], index: 1, kind: input, shape index: {}]
  %s2 = inlined_call_operand.hbm [shape: f32[1,8,128], index: 2, kind: output, shape index: {}]
  %s3 = sld [smem:[#allocation0]]
  $region38: #{tpu_custom_call.1} parent=0
    _
  %s5 = ssub.s32 1, %s3
  %s6 = scalar_select 0, %s5, %s3
  $region1: #{tpu_custom_call.1} parent=0
    #allocation2 [shape = 'u8[8192]{0}', space=vmem, size = 0x2000, scoped, tag = 'input window, operand 0, single buffered']
    #allocation3 [shape = 's32[1]{0}', space=sflag, size = 0x4, scoped, tag = 'scoped memory for tpu_custom_call.1']
    #allocation4 [shape = 's32[1]{0}', space=sflag, size = 0x4, scoped, tag = 'scoped memory for tpu_custom_call.1']
    #allocation5 [shape = 'u8[8192]{0}', space=vmem, size = 0x2000, scoped, tag = 'input window, operand 1, single buffered']
    #allocation6 [shape = 's32[1]{0}', space=sflag, size = 0x4, scoped, tag = 'scoped memory for tpu_custom_call.1']
    #allocation7 [shape = 'u8[4096]{0}', space=vmem, size = 0x1000, scoped, tag = 'output window, operand 0, single buffered']
    %7 = vsyncpa [#allocation3], 0
    %8 = vsyncpa [#allocation6], 0
    %9 = vsyncpa [#allocation4], 0
    // Predicated region
    $region2: #{tpu_custom_call.1} parent=1 // pred_check
      _
    $region3: #{tpu_custom_call.1} parent=1 // pred_check_branch
      %11 = sbr.rel (0) target = $region5
    $region4: #{tpu_custom_call.1} parent=1 // pred_region
      %s12 = sadd.s32 0, 0
      %p13 = scmp.lt.s32.totalorder %s12, 0
      %s14 = scalar_select %p13, %s12, 0
      %s15 = smul.u32 2, %s14
      %s17 = ssub.s32 256, 256
      %18 = vsyncadd [#allocation3], %s17
      %s19 = smul.addr %s15, 128
      %s20 = scalar_lea.hbm %s0, %s19
      %s21 = sshll.u32 [#allocation2], 4
      %s22 = int_to_ptr.vmem [resolvable:$true] %s21
      %27 = dma.hbm_to_vmem [thread:$0]  %s20, 256, %s22, [#allocation3], 128, 128, 8
    $region5: #{tpu_custom_call.1} parent=1 // pred_fallthru
      _
    // Predicated region
    $region6: #{tpu_custom_call.1} parent=1 // pred_check
      _
    $region7: #{tpu_custom_call.1} parent=1 // pred_check_branch
      %29 = sbr.rel (0) target = $region9
    $region8: #{tpu_custom_call.1} parent=1 // pred_region
      %s30 = sadd.s32 0, 0
      %p31 = scmp.lt.s32.totalorder %s30, 0
      %s32 = scalar_select %p31, %s30, 0
      %s33 = smul.u32 2, %s32
      %s35 = ssub.s32 256, 256
      %36 = vsyncadd [#allocation6], %s35
      %s37 = smul.addr %s33, 128
      %s38 = scalar_lea.hbm %s1, %s37
      %s39 = sshll.u32 [#allocation5], 4
      %s40 = int_to_ptr.vmem [resolvable:$true] %s39
      %45 = dma.hbm_to_vmem [thread:$0]  %s38, 256, %s40, [#allocation6], 128, 128, 8
    $region9: #{tpu_custom_call.1} parent=1 // pred_fallthru
      _
    // Predicated region
    $region10: #{tpu_custom_call.1} parent=1 // pred_check
      _
    $region11: #{tpu_custom_call.1} parent=1 // pred_check_branch
      %47 = sbr.rel (0) target = $region13
    $region12: #{tpu_custom_call.1} parent=1 // pred_region
      %48 = dma.done [#allocation3], 256
    $region13: #{tpu_custom_call.1} parent=1 // pred_fallthru
      _
    // Predicated region
    $region14: #{tpu_custom_call.1} parent=1 // pred_check
      _
    $region15: #{tpu_custom_call.1} parent=1 // pred_check_branch
      %50 = sbr.rel (0) target = $region17
    $region16: #{tpu_custom_call.1} parent=1 // pred_region
      %51 = dma.done [#allocation6], 256
    $region17: #{tpu_custom_call.1} parent=1 // pred_fallthru
      _
    %s52 = sadd.s32 0, 0
    %p53 = scmp.lt.s32.totalorder %s52, 0
    %s54 = scalar_select %p53, %s52, 0
    %s55 = smul.u32 2, %s54
    %s56 = sadd.s32 0, 0
    %p57 = scmp.lt.s32.totalorder %s56, 0
    %s58 = scalar_select %p57, %s56, 0
    %s59 = smul.u32 2, %s58
    %s60 = sadd.s32 0, 0
    %p61 = scmp.eq.s32.totalorder 0, 0
    // Predicated region
    $region18: #{tpu_custom_call.1} parent=1 // pred_check
      %p62 = pneg %p61
    $region19: #{tpu_custom_call.1} parent=1 // pred_check_branch
      %64 = sbr.rel (%p62) target = $region21
    $region20: #{tpu_custom_call.1} parent=1 // pred_region
      %65 = vst [vmem:[#allocation7] sm:$0xff] 0.0
    $region21: #{tpu_custom_call.1} parent=1 // pred_fallthru
      _
    %v66 = vld [vmem:[#allocation2] sm:$0xff]
    %v67 = vld [vmem:[#allocation2 + $0x8] sm:$0xff]
    %v68 = vld [vmem:[#allocation5] sm:$0xff]
    %v69 = vld [vmem:[#allocation5 + $0x8] sm:$0xff]
    %v70 = vsub.f32 0.0, %v66
    %v71 = vsub.f32 0.0, %v67
    %v72 = vadd.f32 %v68, 1e-12
    %v73 = vadd.f32 %v69, 1e-12
    %v74 = vlog2.pop %v72
    %v75 = vmul.f32 %v74, 0.6931472
    %v76 = vlog2.pop %v73
    %v77 = vmul.f32 %v76, 0.6931472
    %v78 = vmul.f32 %v70, %v75
    %v79 = vmul.f32 %v71, %v77
    %v80 = vsub.f32 1.0, %v66
    %v81 = vsub.f32 1.0, %v67
    %v82 = vsub.f32 1.0, %v68
    %v83 = vsub.f32 1.0, %v69
    %v84 = vadd.f32 %v82, 1e-12
    %v85 = vadd.f32 %v83, 1e-12
    %v86 = vlog2.pop %v84
    %v87 = vmul.f32 %v86, 0.6931472
    %v88 = vlog2.pop %v85
    %v89 = vmul.f32 %v88, 0.6931472
    %v90 = vmul.f32 %v80, %v87
    %v91 = vmul.f32 %v81, %v89
    %v92 = vsub.f32 %v78, %v90
    %v93 = vsub.f32 %v79, %v91
    %p94 = scmp.lt.s32.totalorder %s60, 0
    // Predicated region
    $region22: #{tpu_custom_call.1} parent=1 // pred_check
      %p95 = pneg %p94
    $region23: #{tpu_custom_call.1} parent=1 // pred_check_branch
      %97 = sbr.rel (%p95) target = $region25
    $region24: #{tpu_custom_call.1} parent=1 // pred_region
      %v98 = vld [vmem:[#allocation7] sm:$0xff]
      %v99 = vadd.f32 %v92, %v93
      %v100 = vadd.f32 %v98, %v99
      %101 = vst [vmem:[#allocation7] sm:$0xff] %v100
    $region25: #{tpu_custom_call.1} parent=1 // pred_fallthru
      _
    %p102 = scmp.eq.s32.totalorder %s60, 0
    // Predicated region
    $region26: #{tpu_custom_call.1} parent=1 // pred_check
      %p103 = pneg %p102
    $region27: #{tpu_custom_call.1} parent=1 // pred_check_branch
      %105 = sbr.rel (%p103) target = $region29
    $region28: #{tpu_custom_call.1} parent=1 // pred_region
      %v106 = vld [vmem:[#allocation7] sm:$0xff]
      %v107 = vadd.f32 %v92, %v93
      %v108 = vadd.f32 %v106, %v107
      %109 = vst [vmem:[#allocation7] sm:$0xff] %v108
    $region29: #{tpu_custom_call.1} parent=1 // pred_fallthru
      _
    // Predicated region
    $region30: #{tpu_custom_call.1} parent=1 // pred_check
      _
    $region31: #{tpu_custom_call.1} parent=1 // pred_check_branch
      %111 = sbr.rel (0) target = $region33
    $region32: #{tpu_custom_call.1} parent=1 // pred_region
      %s113 = ssub.s32 128, 128
      %114 = vsyncadd [#allocation4], %s113
      %s116 = sshll.u32 [#allocation7], 4
      %s117 = int_to_ptr.vmem [resolvable:$true] %s116
      %119 = dma.vmem_to_hbm [thread:$0]  %s117, 128, %s2, [#allocation4]
    $region33: #{tpu_custom_call.1} parent=1 // pred_fallthru
      _
    // Predicated region
    $region34: #{tpu_custom_call.1} parent=1 // pred_check
      _
    $region35: #{tpu_custom_call.1} parent=1 // pred_check_branch
      %121 = sbr.rel (0) target = $region37
    $region36: #{tpu_custom_call.1} parent=1 // pred_region
      %122 = dma.done [#allocation4], 128
    $region37: #{tpu_custom_call.1} parent=1 // pred_fallthru
      _
    %123 = vsyncpa [#allocation3], 1
    %124 = vsyncpa [#allocation6], 1
    %125 = vsyncpa [#allocation4], 1

</llo_original>
